<compile_context>
chip_gen: v7x
topology: tpu7x:2x2x1
jax: 0.10.0
libtpu: 0.0.40
codegen_flags: <defaults>
</compile_context>

<pallas_src>
import math

import jax
import jax.numpy as jnp
from jax.experimental import pallas as pl
from jax.experimental.pallas import tpu as pltpu


def _round_up(x, m):
    return ((x + m - 1) // m) * m


def _direct_kernel(times_ref, inv_ref, out_ref):
    # Used when size % 128 == 0 (output minor dim already lane-dense).
    # times_ref: (T, 1), inv_ref: (1, half), out_ref: (T, size)
    t = times_ref[...]                          # (T, 1)
    inv = inv_ref[...]                          # (1, half)
    half = inv.shape[-1]
    args = t * inv                              # (T, half), multiply-by-reciprocal
    out_ref[:, :half] = jnp.sin(args).astype(out_ref.dtype)
    out_ref[:, half:] = jnp.cos(args).astype(out_ref.dtype)


def _grouped_kernel(times_ref, expand_ref, inv_ref, mask_ref, out_ref):
    # Lane-dense path for size < 128 (or size not a multiple of 128).
    # times_ref:  (T, g)   g consecutive event times per packed row
    # expand_ref: (g, W)   one-hot lane-expansion matrix (exact 0/1)
    # inv_ref:    (1, W)   per-lane 1/denum pattern
    # mask_ref:   (1, W)   1.0 on sin lanes, 0.0 on cos lanes
    # out_ref:    (T, W)   same HBM layout as (T*g, size)
    t = times_ref[...]
    # Exact lane broadcast of each time value across its `size` output lanes:
    # HIGHEST precision keeps the f32 times bit-exact through the MXU.
    t_exp = jnp.dot(t, expand_ref[...],
                    precision=jax.lax.Precision.HIGHEST,
                    preferred_element_type=jnp.float32)        # (T, W)
    args = t_exp * inv_ref[...]                                 # (T, W)
    out = jnp.where(mask_ref[...] > 0.5, jnp.sin(args), jnp.cos(args))
    out_ref[...] = out.astype(out_ref.dtype)


def positional_encoder(times, size, m=1.0, M=2000.0, *, block_bytes=1 << 20,
                       out_dtype=jnp.float32):
    """Pallas TPU implementation of PositionalEncoder.forward.

    times: (B, L) -> returns (B, L, size).
    """
    if size % 2 != 0:
        raise ValueError("Need even size")
    B, L = times.shape
    half = size // 2
    R = B * L

    # Tiny host-side constants (identical expression to the reference module).
    d = jnp.linspace(0.0, 1.0, half, dtype=jnp.float32)
    denum = (m * (5.0 * M / m) ** d).astype(jnp.float32)         # (half,)
    inv_denum = (1.0 / denum).astype(jnp.float32)                # (half,)

    times_flat = times.astype(jnp.float32).reshape(R)

    dim_sem = pltpu.CompilerParams(dimension_semantics=("parallel",))

    if size % 128 == 0:
        # ---- Direct channels-last path: already lane-dense. ----
        tile_r = max(8, min((block_bytes // (size * 4)) // 8 * 8,
                            _round_up(R, 8)))
        r_pad = _round_up(R, tile_r)
        tf = times_flat
        if r_pad != R:
            tf = jnp.pad(tf, (0, r_pad - R))
        tf = tf.reshape(r_pad, 1)
        inv_row = inv_denum.reshape(1, half)

        out = pl.pallas_call(
            _direct_kernel,
            out_shape=jax.ShapeDtypeStruct((r_pad, size), out_dtype),
            grid_spec=pltpu.PrefetchScalarGridSpec(
                num_scalar_prefetch=0,
                grid=(r_pad // tile_r,),
                in_specs=[
                    pl.BlockSpec((tile_r, 1), lambda i: (i, 0)),
                    pl.BlockSpec((1, half), lambda i: (0, 0)),   # constant row
                ],
                out_specs=pl.BlockSpec((tile_r, size), lambda i: (i, 0)),
            ),
            compiler_params=dim_sem,
        )(tf, inv_row)
        if r_pad != R:
            out = out[:R]
        return out.reshape(B, L, size)

    # ---- Lane-dense packed path (size not a multiple of 128). ----
    g = 128 // math.gcd(size, 128)          # rows packed per lane-dense row
    W = g * size                            # packed row width, multiple of 128
    Rg = -(-R // g)                         # packed row count (ceil)

    tile_g = max(8, min((block_bytes // (W * 4)) // 8 * 8,
                        _round_up(Rg, 8)))
    rg_pad = _round_up(Rg, tile_g)
    total = rg_pad * g

    tf = times_flat
    if total != R:
        tf = jnp.pad(tf, (0, total - R))    # sin/cos of 0 is harmless, sliced off
    tf = tf.reshape(rg_pad, g)              # free reshape (same flat layout)

    lane = jnp.arange(W)
    expand = (lane[None, :] // size == jnp.arange(g)[:, None]).astype(jnp.float32)
    inv_pat = jnp.tile(inv_denum, 2 * g).reshape(1, W)
    mask = jnp.tile(
        jnp.concatenate([jnp.ones((half,), jnp.float32),
                         jnp.zeros((half,), jnp.float32)]), g).reshape(1, W)

    out = pl.pallas_call(
        _grouped_kernel,
        out_shape=jax.ShapeDtypeStruct((rg_pad, W), out_dtype),
        grid_spec=pltpu.PrefetchScalarGridSpec(
            num_scalar_prefetch=0,
            grid=(rg_pad // tile_g,),
            in_specs=[
                pl.BlockSpec((tile_g, g), lambda i: (i, 0)),
                pl.BlockSpec((g, W), lambda i: (0, 0)),          # constant
                pl.BlockSpec((1, W), lambda i: (0, 0)),          # constant
                pl.BlockSpec((1, W), lambda i: (0, 0)),          # constant
            ],
            out_specs=pl.BlockSpec((tile_g, W), lambda i: (i, 0)),
        ),
        compiler_params=dim_sem,
    )(tf, expand, inv_pat, mask)

    out = out.reshape(total, size)          # free reshape (same flat layout)
    if total != R:
        out = out[:R]
    return out.reshape(B, L, size)


def _reference(times, size, m=1.0, M=2000.0):
    half = size // 2
    d = jnp.linspace(0.0, 1.0, half, dtype=jnp.float32)
    denum = m * (5.0 * M / m) ** d
    args = times[..., None] / denum
    return jnp.concatenate([jnp.sin(args), jnp.cos(args)], axis=-1)


if __name__ == "__main__":
    key = jax.random.PRNGKey(0)

    # Test 1: lane-dense packed path (size=32 -> g=4, W=128).
    B, L, SIZE = 2, 8, 32
    times = jax.random.uniform(key, (B, L), dtype=jnp.float32) * 100.0
    out = jax.block_until_ready(positional_encoder(times, SIZE))
    ref = _reference(times, SIZE)
    assert out.shape == (B, L, SIZE), out.shape
    assert jnp.allclose(out, ref, atol=1e-5, rtol=1e-5), "mismatch vs reference"

    # Test 2: odd row count + tiny size (exercises padding; size=8 -> g=16).
    B2, L2, SIZE2 = 2, 7, 8
    times2 = jax.random.uniform(jax.random.PRNGKey(1), (B2, L2),
                                dtype=jnp.float32) * 100.0
    out2 = jax.block_until_ready(positional_encoder(times2, SIZE2))
    ref2 = _reference(times2, SIZE2)
    assert out2.shape == (B2, L2, SIZE2), out2.shape
    assert jnp.allclose(out2, ref2, atol=1e-5, rtol=1e-5), "mismatch (padded)"

    # Test 3: direct channels-last path (size multiple of 128).
    B3, L3, SIZE3 = 2, 8, 256
    times3 = jax.random.uniform(jax.random.PRNGKey(2), (B3, L3),
                                dtype=jnp.float32) * 10.0
    out3 = jax.block_until_ready(positional_encoder(times3, SIZE3))
    ref3 = _reference(times3, SIZE3)
    assert out3.shape == (B3, L3, SIZE3), out3.shape
    assert jnp.allclose(out3, ref3, atol=1e-5, rtol=1e-5), "mismatch (direct)"

    print("KERNEL_OK")
</pallas_src>

<mosaic_0001>
module attributes {stable_mosaic.version = 11 : i64} {
  func.func @_grouped_kernel(%arg0: i32, %arg1: memref<8x4xf32, #tpu.memory_space<vmem>>, %arg2: memref<4x128xf32, #tpu.memory_space<vmem>>, %arg3: memref<1x128xf32, #tpu.memory_space<vmem>>, %arg4: memref<1x128xf32, #tpu.memory_space<vmem>>, %arg5: memref<8x128xf32, #tpu.memory_space<vmem>>) attributes {dimension_semantics = [#tpu.dimension_semantics<parallel>], iteration_bounds = array<i64: 1>, scalar_prefetch = 0 : i64, scratch_operands = 0 : i64, tpu.core_type = #tpu.core_type<tc>, window_params = [{transform_indices = @transform_0, window_bounds = array<i64: 8, 4>}, {pipeline_mode = #tpu.pipeline_mode<synchronous>, transform_indices = @transform_1, window_bounds = array<i64: 4, 128>}, {pipeline_mode = #tpu.pipeline_mode<synchronous>, transform_indices = @transform_2, window_bounds = array<i64: 1, 128>}, {pipeline_mode = #tpu.pipeline_mode<synchronous>, transform_indices = @transform_3, window_bounds = array<i64: 1, 128>}, {transform_indices = @transform_4, window_bounds = array<i64: 8, 128>}]} {
    %c0 = arith.constant 0 : index
    %c0_0 = arith.constant 0 : index
    %0 = vector.load %arg1[%c0, %c0_0] : memref<8x4xf32, #tpu.memory_space<vmem>>, vector<8x4xf32>
    %c0_1 = arith.constant 0 : index
    %c0_2 = arith.constant 0 : index
    %1 = vector.load %arg2[%c0_1, %c0_2] : memref<4x128xf32, #tpu.memory_space<vmem>>, vector<4x128xf32>
    %cst = arith.constant dense<0.000000e+00> : vector<8x128xf32>
    %2 = tpu.matmul %0, %1, %cst {dimension_numbers = #tpu.dot_dimension_numbers<[1], [0], [0], [1], [0, 0, 1, 1], [], []>, precision = #tpu.contract_precision<fp32>} : vector<8x4xf32>, vector<4x128xf32>, vector<8x128xf32> -> vector<8x128xf32>
    %c0_3 = arith.constant 0 : index
    %c0_4 = arith.constant 0 : index
    %3 = vector.load %arg3[%c0_3, %c0_4] : memref<1x128xf32, #tpu.memory_space<vmem>>, vector<1x128xf32>
    %4 = vector.broadcast %3 : vector<1x128xf32> to vector<8x128xf32>
    %5 = arith.mulf %2, %4 : vector<8x128xf32>
    %c0_5 = arith.constant 0 : index
    %c0_6 = arith.constant 0 : index
    %6 = vector.load %arg4[%c0_5, %c0_6] : memref<1x128xf32, #tpu.memory_space<vmem>>, vector<1x128xf32>
    %cst_7 = arith.constant 5.000000e-01 : f32
    %7 = vector.broadcast %cst_7 : f32 to vector<1x128xf32>
    %8 = arith.cmpf ogt, %6, %7 : vector<1x128xf32>
    %9 = math.sin %5 : vector<8x128xf32>
    %10 = math.cos %5 : vector<8x128xf32>
    %11 = vector.shape_cast %8 : vector<1x128xi1> to vector<1x128xi1>
    %12 = vector.broadcast %11 : vector<1x128xi1> to vector<8x128xi1>
    %13 = arith.select %12, %9, %10 : vector<8x128xi1>, vector<8x128xf32>
    %c0_8 = arith.constant 0 : index
    %c0_9 = arith.constant 0 : index
    %14 = vector.load %arg5[%c0_8, %c0_9] : memref<8x128xf32, #tpu.memory_space<vmem>>, vector<8x128xf32>
    tpu.vector_store %arg5[%c0_8, %c0_9], %13 {strides = array<i32>} : memref<8x128xf32, #tpu.memory_space<vmem>>, vector<8x128xf32>,
    return
  }
  func.func @transform_0(%arg0: i32) -> (i32, i32) {
    %c0_i32 = arith.constant 0 : i32
    %c0_i32_0 = arith.constant 0 : i32
    return %arg0, %c0_i32 : i32, i32
  }
  func.func @transform_1(%arg0: i32) -> (i32, i32) {
    %c0_i32 = arith.constant 0 : i32
    %c0_i32_0 = arith.constant 0 : i32
    %c0_i32_1 = arith.constant 0 : i32
    return %c0_i32, %c0_i32_0 : i32, i32
  }
  func.func @transform_2(%arg0: i32) -> (i32, i32) {
    %c0_i32 = arith.constant 0 : i32
    %c0_i32_0 = arith.constant 0 : i32
    %c0_i32_1 = arith.constant 0 : i32
    return %c0_i32, %c0_i32_0 : i32, i32
  }
  func.func @transform_3(%arg0: i32) -> (i32, i32) {
    %c0_i32 = arith.constant 0 : i32
    %c0_i32_0 = arith.constant 0 : i32
    %c0_i32_1 = arith.constant 0 : i32
    return %c0_i32, %c0_i32_0 : i32, i32
  }
  func.func @transform_4(%arg0: i32) -> (i32, i32) {
    %c0_i32 = arith.constant 0 : i32
    %c0_i32_0 = arith.constant 0 : i32
    return %arg0, %c0_i32 : i32, i32
  }
}

</mosaic_0001>

<llo_original>
// kernel: tpu_custom_call.1
$region0: #{tpu_custom_call.1}
  #allocation0 [shape = 'u32[]', space=smem, size = 0x4, offset = 0x4, fixed_abs, tag = 'smem constant byte address 0x4 - core index']
  #allocation1 [shape = 'u32[144,128]{1,0:T(1,128)}', space=vmem, size = 0x12000, scoped, tag = 'internal scratch']
  %s0 = inlined_call_operand.vmem [shape: f32[8,4], index: 0, kind: input, shape index: {}]
  %s1 = inlined_call_operand.vmem [shape: f32[4,128], index: 1, kind: input, shape index: {}]
  %s2 = inlined_call_operand.vmem [shape: f32[1,128], index: 2, kind: input, shape index: {}]
  %s3 = inlined_call_operand.vmem [shape: f32[1,128], index: 3, kind: input, shape index: {}]
  %s4 = inlined_call_operand.hbm [shape: f32[8,128], index: 4, kind: output, shape index: {}]
  %s5 = sld [smem:[#allocation0]]
  $region26: #{tpu_custom_call.1} parent=0
    _
  %s7 = ssub.s32 1, %s5
  %s8 = scalar_select 0, %s7, %s5
  $region1: #{tpu_custom_call.1} parent=0
    #allocation2 [shape = 'u8[4096]{0}', space=vmem, size = 0x1000, scoped, tag = 'output window, operand 0, single buffered']
    #allocation3 [shape = 's32[1]{0}', space=sflag, size = 0x4, scoped, tag = 'scoped memory for tpu_custom_call.1']
    %9 = vsyncpa [#allocation3], 0
    // Predicated region
    $region2: #{tpu_custom_call.1} parent=1 // pred_check
      _
    $region3: #{tpu_custom_call.1} parent=1 // pred_check_branch
      %11 = sbr.rel (0) target = $region5
    $region4: #{tpu_custom_call.1} parent=1 // pred_region
      _
    $region5: #{tpu_custom_call.1} parent=1 // pred_fallthru
      _
    // Predicated region
    $region6: #{tpu_custom_call.1} parent=1 // pred_check
      _
    $region7: #{tpu_custom_call.1} parent=1 // pred_check_branch
      %13 = sbr.rel (0) target = $region9
    $region8: #{tpu_custom_call.1} parent=1 // pred_region
      _
    $region9: #{tpu_custom_call.1} parent=1 // pred_fallthru
      _
    // Predicated region
    $region10: #{tpu_custom_call.1} parent=1 // pred_check
      _
    $region11: #{tpu_custom_call.1} parent=1 // pred_check_branch
      %15 = sbr.rel (0) target = $region13
    $region12: #{tpu_custom_call.1} parent=1 // pred_region
      _
    $region13: #{tpu_custom_call.1} parent=1 // pred_fallthru
      _
    // Predicated region
    $region14: #{tpu_custom_call.1} parent=1 // pred_check
      _
    $region15: #{tpu_custom_call.1} parent=1 // pred_check_branch
      %17 = sbr.rel (0) target = $region17
    $region16: #{tpu_custom_call.1} parent=1 // pred_region
      _
    $region17: #{tpu_custom_call.1} parent=1 // pred_fallthru
      _
    %v18 = vld [vmem:[%s0] sm:$0xff]
    %v19 = vld [vmem:[%s1] sm:$0xf]
    %vm20 = vcmask 31744
    %v22 = vsel %vm20, %v18, 0
    %vm24 = vcmask 1043456
    %v26 = vsel %vm24, %v19, 0
    %28 = vmatprep.subr.mxu0 0.0
    %v29 = vand.u32 %v26, 4294901760
    %30 = vmatpush1.msra.mxu0 %v29
    %31 = vmatprep.subr.mxu0 0.0
    %32 = vmatpush1.msra.mxu0 0.0
    %33 = vmatprep.subr.mxu0 0.0
    %34 = vmatpush1.msra.mxu0 0.0
    %35 = vmatprep.subr.mxu0 0.0
    %36 = vmatpush1.msra.mxu0 0.0
    %37 = vmatprep.subr.mxu0 0.0
    %38 = vmatpush1.msra.mxu0 0.0
    %39 = vmatprep.subr.mxu0 0.0
    %40 = vmatpush1.msra.mxu0 0.0
    %41 = vmatprep.subr.mxu0 0.0
    %42 = vmatpush1.msra.mxu0 0.0
    %43 = vmatprep.subr.mxu0 0.0
    %44 = vmatpush1.msra.mxu0 0.0
    %45 = vmatprep.subr.mxu0 0.0
    %46 = vmatpush1.msra.mxu0 0.0
    %47 = vmatprep.subr.mxu0 0.0
    %48 = vmatpush1.msra.mxu0 0.0
    %49 = vmatprep.subr.mxu0 0.0
    %50 = vmatpush1.msra.mxu0 0.0
    %51 = vmatprep.subr.mxu0 0.0
    %52 = vmatpush1.msra.mxu0 0.0
    %53 = vmatprep.subr.mxu0 0.0
    %54 = vmatpush1.msra.mxu0 0.0
    %55 = vmatprep.subr.mxu0 0.0
    %56 = vmatpush1.msra.mxu0 0.0
    %57 = vmatprep.subr.mxu0 0.0
    %58 = vmatpush1.msra.mxu0 0.0
    %59 = vmatprep.subr.mxu0 0.0
    %60 = vmatpush1.msra.mxu0 0.0
    %61 = vmatprep.subr.mxu0 0.0
    %62 = vmatpush1.msra.mxu0 0.0
    %63 = vmatprep.subr.mxu0 0.0
    %64 = vmatpush1.msra.mxu0 0.0
    %65 = vmatprep.subr.mxu0 0.0
    %66 = vmatpush1.msra.mxu0 0.0
    %67 = vmatprep.subr.mxu0 0.0
    %68 = vmatpush1.msra.mxu0 0.0
    %69 = vmatprep.subr.mxu0 0.0
    %70 = vmatpush1.msra.mxu0 0.0
    %71 = vmatprep.subr.mxu0 0.0
    %72 = vmatpush1.msra.mxu0 0.0
    %73 = vmatprep.subr.mxu0 0.0
    %74 = vmatpush1.msra.mxu0 0.0
    %75 = vmatprep.subr.mxu0 0.0
    %76 = vmatpush1.msra.mxu0 0.0
    %77 = vmatprep.subr.mxu0 0.0
    %78 = vmatpush1.msra.mxu0 0.0
    %79 = vmatprep.subr.mxu0 0.0
    %80 = vmatpush1.msra.mxu0 0.0
    %81 = vmatprep.subr.mxu0 0.0
    %82 = vmatpush1.msra.mxu0 0.0
    %83 = vmatprep.subr.mxu0 0.0
    %84 = vmatpush1.msra.mxu0 0.0
    %85 = vmatprep.subr.mxu0 0.0
    %86 = vmatpush1.msra.mxu0 0.0
    %87 = vmatprep.subr.mxu0 0.0
    %88 = vmatpush1.msra.mxu0 0.0
    %89 = vmatprep.subr.mxu0 0.0
    %90 = vmatpush1.msra.mxu0 0.0
    %91 = vmatprep.subr.mxu0 0.0
    %92 = vmatpush1.msra.mxu0 0.0
    %93 = vmatprep.mubr.f32.mxu0 0.0
    %v94 = vand.u32 %v22, 4294901760
    %v95 = vsub.f32 %v22, %v94
    %v96 = vand.u32 %v95, 4294901760
    %v97 = vsub.f32 %v95, %v96
    %v98 = vand.u32 %v97, 4294901760
    %99 = vmatmul.mubr.f32.gmra.mrb[0].mxu0 %v98
    %v100 = vpop.f32.mrb[0].mxu0
    %v101 = vadd.f32 0.0, %v100
    %v102 = vpop.f32.mrb[0].mxu0
    %103 = vdwg.mxu0
    %104 = vmatprep.subr.mxu0 0.0
    %v105 = vand.u32 %v26, 4294901760
    %v106 = vsub.f32 %v26, %v105
    %v107 = vand.u32 %v106, 4294901760
    %v108 = vsub.f32 %v106, %v107
    %v109 = vand.u32 %v108, 4294901760
    %110 = vmatpush1.msra.mxu0 %v109
    %111 = vmatprep.subr.mxu0 0.0
    %112 = vmatpush1.msra.mxu0 0.0
    %113 = vmatprep.subr.mxu0 0.0
    %114 = vmatpush1.msra.mxu0 0.0
    %115 = vmatprep.subr.mxu0 0.0
    %116 = vmatpush1.msra.mxu0 0.0
    %117 = vmatprep.subr.mxu0 0.0
    %118 = vmatpush1.msra.mxu0 0.0
    %119 = vmatprep.subr.mxu0 0.0
    %120 = vmatpush1.msra.mxu0 0.0
    %121 = vmatprep.subr.mxu0 0.0
    %122 = vmatpush1.msra.mxu0 0.0
    %123 = vmatprep.subr.mxu0 0.0
    %124 = vmatpush1.msra.mxu0 0.0
    %125 = vmatprep.subr.mxu0 0.0
    %126 = vmatpush1.msra.mxu0 0.0
    %127 = vmatprep.subr.mxu0 0.0
    %128 = vmatpush1.msra.mxu0 0.0
    %129 = vmatprep.subr.mxu0 0.0
    %130 = vmatpush1.msra.mxu0 0.0
    %131 = vmatprep.subr.mxu0 0.0
    %132 = vmatpush1.msra.mxu0 0.0
    %133 = vmatprep.subr.mxu0 0.0
    %134 = vmatpush1.msra.mxu0 0.0
    %135 = vmatprep.subr.mxu0 0.0
    %136 = vmatpush1.msra.mxu0 0.0
    %137 = vmatprep.subr.mxu0 0.0
    %138 = vmatpush1.msra.mxu0 0.0
    %139 = vmatprep.subr.mxu0 0.0
    %140 = vmatpush1.msra.mxu0 0.0
    %141 = vmatprep.subr.mxu0 0.0
    %142 = vmatpush1.msra.mxu0 0.0
    %143 = vmatprep.subr.mxu0 0.0
    %144 = vmatpush1.msra.mxu0 0.0
    %145 = vmatprep.subr.mxu0 0.0
    %146 = vmatpush1.msra.mxu0 0.0
    %147 = vmatprep.subr.mxu0 0.0
    %148 = vmatpush1.msra.mxu0 0.0
    %149 = vmatprep.subr.mxu0 0.0
    %150 = vmatpush1.msra.mxu0 0.0
    %151 = vmatprep.subr.mxu0 0.0
    %152 = vmatpush1.msra.mxu0 0.0
    %153 = vmatprep.subr.mxu0 0.0
    %154 = vmatpush1.msra.mxu0 0.0
    %155 = vmatprep.subr.mxu0 0.0
    %156 = vmatpush1.msra.mxu0 0.0
    %157 = vmatprep.subr.mxu0 0.0
    %158 = vmatpush1.msra.mxu0 0.0
    %159 = vmatprep.subr.mxu0 0.0
    %160 = vmatpush1.msra.mxu0 0.0
    %161 = vmatprep.subr.mxu0 0.0
    %162 = vmatpush1.msra.mxu0 0.0
    %163 = vmatprep.subr.mxu0 0.0
    %164 = vmatpush1.msra.mxu0 0.0
    %165 = vmatprep.subr.mxu0 0.0
    %166 = vmatpush1.msra.mxu0 0.0
    %167 = vmatprep.subr.mxu0 0.0
    %168 = vmatpush1.msra.mxu0 0.0
    %169 = vmatprep.subr.mxu0 0.0
    %170 = vmatpush1.msra.mxu0 0.0
    %171 = vmatprep.subr.mxu0 0.0
    %172 = vmatpush1.msra.mxu0 0.0
    %173 = vmatprep.mubr.f32.mxu0 0.0
    %v174 = vand.u32 %v22, 4294901760
    %175 = vmatmul.mubr.f32.gmra.mrb[0].mxu0 %v174
    %v176 = vpop.f32.mrb[0].mxu0
    %v177 = vadd.f32 %v101, %v176
    %v178 = vpop.f32.mrb[0].mxu0
    %179 = vdwg.mxu0
    %180 = vmatprep.subr.mxu0 0.0
    %v181 = vand.u32 %v26, 4294901760
    %v182 = vsub.f32 %v26, %v181
    %183 = vmatpush1.msra.mxu0 %v182
    %184 = vmatprep.subr.mxu0 0.0
    %185 = vmatpush1.msra.mxu0 0.0
    %186 = vmatprep.subr.mxu0 0.0
    %187 = vmatpush1.msra.mxu0 0.0
    %188 = vmatprep.subr.mxu0 0.0
    %189 = vmatpush1.msra.mxu0 0.0
    %190 = vmatprep.subr.mxu0 0.0
    %191 = vmatpush1.msra.mxu0 0.0
    %192 = vmatprep.subr.mxu0 0.0
    %193 = vmatpush1.msra.mxu0 0.0
    %194 = vmatprep.subr.mxu0 0.0
    %195 = vmatpush1.msra.mxu0 0.0
    %196 = vmatprep.subr.mxu0 0.0
    %197 = vmatpush1.msra.mxu0 0.0
    %198 = vmatprep.subr.mxu0 0.0
    %199 = vmatpush1.msra.mxu0 0.0
    %200 = vmatprep.subr.mxu0 0.0
    %201 = vmatpush1.msra.mxu0 0.0
    %202 = vmatprep.subr.mxu0 0.0
    %203 = vmatpush1.msra.mxu0 0.0
    %204 = vmatprep.subr.mxu0 0.0
    %205 = vmatpush1.msra.mxu0 0.0
    %206 = vmatprep.subr.mxu0 0.0
    %207 = vmatpush1.msra.mxu0 0.0
    %208 = vmatprep.subr.mxu0 0.0
    %209 = vmatpush1.msra.mxu0 0.0
    %210 = vmatprep.subr.mxu0 0.0
    %211 = vmatpush1.msra.mxu0 0.0
    %212 = vmatprep.subr.mxu0 0.0
    %213 = vmatpush1.msra.mxu0 0.0
    %214 = vmatprep.subr.mxu0 0.0
    %215 = vmatpush1.msra.mxu0 0.0
    %216 = vmatprep.subr.mxu0 0.0
    %217 = vmatpush1.msra.mxu0 0.0
    %218 = vmatprep.subr.mxu0 0.0
    %219 = vmatpush1.msra.mxu0 0.0
    %220 = vmatprep.subr.mxu0 0.0
    %221 = vmatpush1.msra.mxu0 0.0
    %222 = vmatprep.subr.mxu0 0.0
    %223 = vmatpush1.msra.mxu0 0.0
    %224 = vmatprep.subr.mxu0 0.0
    %225 = vmatpush1.msra.mxu0 0.0
    %226 = vmatprep.subr.mxu0 0.0
    %227 = vmatpush1.msra.mxu0 0.0
    %228 = vmatprep.subr.mxu0 0.0
    %229 = vmatpush1.msra.mxu0 0.0
    %230 = vmatprep.subr.mxu0 0.0
    %231 = vmatpush1.msra.mxu0 0.0
    %232 = vmatprep.subr.mxu0 0.0
    %233 = vmatpush1.msra.mxu0 0.0
    %234 = vmatprep.subr.mxu0 0.0
    %235 = vmatpush1.msra.mxu0 0.0
    %236 = vmatprep.subr.mxu0 0.0
    %237 = vmatpush1.msra.mxu0 0.0
    %238 = vmatprep.subr.mxu0 0.0
    %239 = vmatpush1.msra.mxu0 0.0
    %240 = vmatprep.subr.mxu0 0.0
    %241 = vmatpush1.msra.mxu0 0.0
    %242 = vmatprep.subr.mxu0 0.0
    %243 = vmatpush1.msra.mxu0 0.0
    %244 = vmatprep.subr.mxu0 0.0
    %245 = vmatpush1.msra.mxu0 0.0
    %246 = vmatprep.mubr.f32.mxu0 0.0
    %v247 = vand.u32 %v22, 4294901760
    %v248 = vsub.f32 %v22, %v247
    %249 = vmatmul.mubr.f32.gmra.mrb[0].mxu0 %v248
    %v250 = vpop.f32.mrb[0].mxu0
    %v251 = vadd.f32 %v177, %v250
    %v252 = vpop.f32.mrb[0].mxu0
    %253 = vdwg.mxu0
    %254 = vmatprep.subr.mxu0 0.0
    %v255 = vand.u32 %v26, 4294901760
    %256 = vmatpush1.msra.mxu0 %v255
    %257 = vmatprep.subr.mxu0 0.0
    %258 = vmatpush1.msra.mxu0 0.0
    %259 = vmatprep.subr.mxu0 0.0
    %260 = vmatpush1.msra.mxu0 0.0
    %261 = vmatprep.subr.mxu0 0.0
    %262 = vmatpush1.msra.mxu0 0.0
    %263 = vmatprep.subr.mxu0 0.0
    %264 = vmatpush1.msra.mxu0 0.0
    %265 = vmatprep.subr.mxu0 0.0
    %266 = vmatpush1.msra.mxu0 0.0
    %267 = vmatprep.subr.mxu0 0.0
    %268 = vmatpush1.msra.mxu0 0.0
    %269 = vmatprep.subr.mxu0 0.0
    %270 = vmatpush1.msra.mxu0 0.0
    %271 = vmatprep.subr.mxu0 0.0
    %272 = vmatpush1.msra.mxu0 0.0
    %273 = vmatprep.subr.mxu0 0.0
    %274 = vmatpush1.msra.mxu0 0.0
    %275 = vmatprep.subr.mxu0 0.0
    %276 = vmatpush1.msra.mxu0 0.0
    %277 = vmatprep.subr.mxu0 0.0
    %278 = vmatpush1.msra.mxu0 0.0
    %279 = vmatprep.subr.mxu0 0.0
    %280 = vmatpush1.msra.mxu0 0.0
    %281 = vmatprep.subr.mxu0 0.0
    %282 = vmatpush1.msra.mxu0 0.0
    %283 = vmatprep.subr.mxu0 0.0
    %284 = vmatpush1.msra.mxu0 0.0
    %285 = vmatprep.subr.mxu0 0.0
    %286 = vmatpush1.msra.mxu0 0.0
    %287 = vmatprep.subr.mxu0 0.0
    %288 = vmatpush1.msra.mxu0 0.0
    %289 = vmatprep.subr.mxu0 0.0
    %290 = vmatpush1.msra.mxu0 0.0
    %291 = vmatprep.subr.mxu0 0.0
    %292 = vmatpush1.msra.mxu0 0.0
    %293 = vmatprep.subr.mxu0 0.0
    %294 = vmatpush1.msra.mxu0 0.0
    %295 = vmatprep.subr.mxu0 0.0
    %296 = vmatpush1.msra.mxu0 0.0
    %297 = vmatprep.subr.mxu0 0.0
    %298 = vmatpush1.msra.mxu0 0.0
    %299 = vmatprep.subr.mxu0 0.0
    %300 = vmatpush1.msra.mxu0 0.0
    %301 = vmatprep.subr.mxu0 0.0
    %302 = vmatpush1.msra.mxu0 0.0
    %303 = vmatprep.subr.mxu0 0.0
    %304 = vmatpush1.msra.mxu0 0.0
    %305 = vmatprep.subr.mxu0 0.0
    %306 = vmatpush1.msra.mxu0 0.0
    %307 = vmatprep.subr.mxu0 0.0
    %308 = vmatpush1.msra.mxu0 0.0
    %309 = vmatprep.subr.mxu0 0.0
    %310 = vmatpush1.msra.mxu0 0.0
    %311 = vmatprep.subr.mxu0 0.0
    %312 = vmatpush1.msra.mxu0 0.0
    %313 = vmatprep.subr.mxu0 0.0
    %314 = vmatpush1.msra.mxu0 0.0
    %315 = vmatprep.subr.mxu0 0.0
    %316 = vmatpush1.msra.mxu0 0.0
    %317 = vmatprep.subr.mxu0 0.0
    %318 = vmatpush1.msra.mxu0 0.0
    %319 = vmatprep.mubr.f32.mxu0 0.0
    %v320 = vand.u32 %v22, 4294901760
    %v321 = vsub.f32 %v22, %v320
    %v322 = vand.u32 %v321, 4294901760
    %323 = vmatmul.mubr.f32.gmra.mrb[0].mxu0 %v322
    %v324 = vpop.f32.mrb[0].mxu0
    %v325 = vadd.f32 %v251, %v324
    %v326 = vpop.f32.mrb[0].mxu0
    %327 = vdwg.mxu0
    %328 = vmatprep.subr.mxu0 0.0
    %v329 = vand.u32 %v26, 4294901760
    %v330 = vsub.f32 %v26, %v329
    %v331 = vand.u32 %v330, 4294901760
    %332 = vmatpush1.msra.mxu0 %v331
    %333 = vmatprep.subr.mxu0 0.0
    %334 = vmatpush1.msra.mxu0 0.0
    %335 = vmatprep.subr.mxu0 0.0
    %336 = vmatpush1.msra.mxu0 0.0
    %337 = vmatprep.subr.mxu0 0.0
    %338 = vmatpush1.msra.mxu0 0.0
    %339 = vmatprep.subr.mxu0 0.0
    %340 = vmatpush1.msra.mxu0 0.0
    %341 = vmatprep.subr.mxu0 0.0
    %342 = vmatpush1.msra.mxu0 0.0
    %343 = vmatprep.subr.mxu0 0.0
    %344 = vmatpush1.msra.mxu0 0.0
    %345 = vmatprep.subr.mxu0 0.0
    %346 = vmatpush1.msra.mxu0 0.0
    %347 = vmatprep.subr.mxu0 0.0
    %348 = vmatpush1.msra.mxu0 0.0
    %349 = vmatprep.subr.mxu0 0.0
    %350 = vmatpush1.msra.mxu0 0.0
    %351 = vmatprep.subr.mxu0 0.0
    %352 = vmatpush1.msra.mxu0 0.0
    %353 = vmatprep.subr.mxu0 0.0
    %354 = vmatpush1.msra.mxu0 0.0
    %355 = vmatprep.subr.mxu0 0.0
    %356 = vmatpush1.msra.mxu0 0.0
    %357 = vmatprep.subr.mxu0 0.0
    %358 = vmatpush1.msra.mxu0 0.0
    %359 = vmatprep.subr.mxu0 0.0
    %360 = vmatpush1.msra.mxu0 0.0
    %361 = vmatprep.subr.mxu0 0.0
    %362 = vmatpush1.msra.mxu0 0.0
    %363 = vmatprep.subr.mxu0 0.0
    %364 = vmatpush1.msra.mxu0 0.0
    %365 = vmatprep.subr.mxu0 0.0
    %366 = vmatpush1.msra.mxu0 0.0
    %367 = vmatprep.subr.mxu0 0.0
    %368 = vmatpush1.msra.mxu0 0.0
    %369 = vmatprep.subr.mxu0 0.0
    %370 = vmatpush1.msra.mxu0 0.0
    %371 = vmatprep.subr.mxu0 0.0
    %372 = vmatpush1.msra.mxu0 0.0
    %373 = vmatprep.subr.mxu0 0.0
    %374 = vmatpush1.msra.mxu0 0.0
    %375 = vmatprep.subr.mxu0 0.0
    %376 = vmatpush1.msra.mxu0 0.0
    %377 = vmatprep.subr.mxu0 0.0
    %378 = vmatpush1.msra.mxu0 0.0
    %379 = vmatprep.subr.mxu0 0.0
    %380 = vmatpush1.msra.mxu0 0.0
    %381 = vmatprep.subr.mxu0 0.0
    %382 = vmatpush1.msra.mxu0 0.0
    %383 = vmatprep.subr.mxu0 0.0
    %384 = vmatpush1.msra.mxu0 0.0
    %385 = vmatprep.subr.mxu0 0.0
    %386 = vmatpush1.msra.mxu0 0.0
    %387 = vmatprep.subr.mxu0 0.0
    %388 = vmatpush1.msra.mxu0 0.0
    %389 = vmatprep.subr.mxu0 0.0
    %390 = vmatpush1.msra.mxu0 0.0
    %391 = vmatprep.subr.mxu0 0.0
    %392 = vmatpush1.msra.mxu0 0.0
    %393 = vmatprep.subr.mxu0 0.0
    %394 = vmatpush1.msra.mxu0 0.0
    %395 = vmatprep.mubr.f32.mxu0 0.0
    %v396 = vand.u32 %v22, 4294901760
    %397 = vmatmul.mubr.f32.gmra.mrb[0].mxu0 %v396
    %v398 = vpop.f32.mrb[0].mxu0
    %v399 = vadd.f32 %v325, %v398
    %v400 = vpop.f32.mrb[0].mxu0
    %401 = vdwg.mxu0
    %402 = vmatprep.subr.mxu0 0.0
    %v403 = vand.u32 %v26, 4294901760
    %404 = vmatpush1.msra.mxu0 %v403
    %405 = vmatprep.subr.mxu0 0.0
    %406 = vmatpush1.msra.mxu0 0.0
    %407 = vmatprep.subr.mxu0 0.0
    %408 = vmatpush1.msra.mxu0 0.0
    %409 = vmatprep.subr.mxu0 0.0
    %410 = vmatpush1.msra.mxu0 0.0
    %411 = vmatprep.subr.mxu0 0.0
    %412 = vmatpush1.msra.mxu0 0.0
    %413 = vmatprep.subr.mxu0 0.0
    %414 = vmatpush1.msra.mxu0 0.0
    %415 = vmatprep.subr.mxu0 0.0
    %416 = vmatpush1.msra.mxu0 0.0
    %417 = vmatprep.subr.mxu0 0.0
    %418 = vmatpush1.msra.mxu0 0.0
    %419 = vmatprep.subr.mxu0 0.0
    %420 = vmatpush1.msra.mxu0 0.0
    %421 = vmatprep.subr.mxu0 0.0
    %422 = vmatpush1.msra.mxu0 0.0
    %423 = vmatprep.subr.mxu0 0.0
    %424 = vmatpush1.msra.mxu0 0.0
    %425 = vmatprep.subr.mxu0 0.0
    %426 = vmatpush1.msra.mxu0 0.0
    %427 = vmatprep.subr.mxu0 0.0
    %428 = vmatpush1.msra.mxu0 0.0
    %429 = vmatprep.subr.mxu0 0.0
    %430 = vmatpush1.msra.mxu0 0.0
    %431 = vmatprep.subr.mxu0 0.0
    %432 = vmatpush1.msra.mxu0 0.0
    %433 = vmatprep.subr.mxu0 0.0
    %434 = vmatpush1.msra.mxu0 0.0
    %435 = vmatprep.subr.mxu0 0.0
    %436 = vmatpush1.msra.mxu0 0.0
    %437 = vmatprep.subr.mxu0 0.0
    %438 = vmatpush1.msra.mxu0 0.0
    %439 = vmatprep.subr.mxu0 0.0
    %440 = vmatpush1.msra.mxu0 0.0
    %441 = vmatprep.subr.mxu0 0.0
    %442 = vmatpush1.msra.mxu0 0.0
    %443 = vmatprep.subr.mxu0 0.0
    %444 = vmatpush1.msra.mxu0 0.0
    %445 = vmatprep.subr.mxu0 0.0
    %446 = vmatpush1.msra.mxu0 0.0
    %447 = vmatprep.subr.mxu0 0.0
    %448 = vmatpush1.msra.mxu0 0.0
    %449 = vmatprep.subr.mxu0 0.0
    %450 = vmatpush1.msra.mxu0 0.0
    %451 = vmatprep.subr.mxu0 0.0
    %452 = vmatpush1.msra.mxu0 0.0
    %453 = vmatprep.subr.mxu0 0.0
    %454 = vmatpush1.msra.mxu0 0.0
    %455 = vmatprep.subr.mxu0 0.0
    %456 = vmatpush1.msra.mxu0 0.0
    %457 = vmatprep.subr.mxu0 0.0
    %458 = vmatpush1.msra.mxu0 0.0
    %459 = vmatprep.subr.mxu0 0.0
    %460 = vmatpush1.msra.mxu0 0.0
    %461 = vmatprep.subr.mxu0 0.0
    %462 = vmatpush1.msra.mxu0 0.0
    %463 = vmatprep.subr.mxu0 0.0
    %464 = vmatpush1.msra.mxu0 0.0
    %465 = vmatprep.subr.mxu0 0.0
    %466 = vmatpush1.msra.mxu0 0.0
    %467 = vmatprep.mubr.f32.mxu0 0.0
    %v468 = vand.u32 %v22, 4294901760
    %469 = vmatmul.mubr.f32.gmra.mrb[0].mxu0 %v468
    %v470 = vpop.f32.mrb[0].mxu0
    %v471 = vadd.f32 %v399, %v470
    %v472 = vpop.f32.mrb[0].mxu0
    %473 = vdwg.mxu0
    %v474 = vld [vmem:[%s2] sm:$0x1]
    %v476 = vlaneseq
    %v477 = vshrl.u32 %v476, 7
    %v478 = vsub.s32 0, %v477
    %v479 = vrot.slane %v474, %v478
    %v481 = vmul.f32 %v471, %v479
    %v482 = vld [vmem:[%s3] sm:$0x1]
    %vm483 = vcmp.gt.f32.partialorder %v482, 0.5
    %v484 = vand.u32 2147483647, %v481
    %vm485 = vcmp.le.f32.partialorder %v484, 0.7853982
    %vm486 = vcmp.lt.s32.totalorder %v481, 0
    %v487 = vand.u32 %v481, 2139095040
    %v488 = vshrl.u32 %v487, 23
    %v489 = vsub.s32 %v488, 127
    %v490 = vand.u32 2147483647, %v481
    %v491 = vand.u32 %v490, 8388607
    %v492 = vor.u32 %v491, 8388608
    %v493 = vsub.s32 0, %v492
    %v494 = vadd.s32 %v489, 1
    %vm495 = vcmp.gt.s32.totalorder %v494, 0
    %v496 = vsel %vm495, %v494, 0
    %v497 = vshrl.u32 %v496, 5
    %v498 = vand.u32 %v496, 31
    %v499 = vsub.s32 32, %v498
    %v500 = vshrl.u32 683565275, %v499
    %v501 = vshll.u32 683565275, %v498
    %v502 = vshrl.u32 2475754826, %v499
    %v503 = vor.u32 %v501, %v502
    %v504 = vshll.u32 2475754826, %v498
    %v505 = vshrl.u32 2131351028, %v499
    %v506 = vor.u32 %v504, %v505
    %v507 = vshll.u32 2131351028, %v498
    %v508 = vshrl.u32 2102212464, %v499
    %v509 = vor.u32 %v507, %v508
    %v510 = vshll.u32 2102212464, %v498
    %v511 = vshrl.u32 920167782, %v499
    %v512 = vor.u32 %v510, %v511
    %v513 = vshll.u32 920167782, %v498
    %v514 = vshrl.u32 1326507024, %v499
    %v515 = vor.u32 %v513, %v514
    %vm516 = vcmp.lt.s32.totalorder %v497, 1
    %vm517 = vcmp.lt.s32.totalorder %v497, 2
    %vm518 = vcmp.lt.s32.totalorder %v497, 3
    %vm519 = vcmp.lt.s32.totalorder %v497, 4
    %v520 = vsel %vm516, %v500, %v503
    %v521 = vsel %vm519, %v509, 2102212464
    %v522 = vsel %vm518, %v506, %v521
    %v523 = vsel %vm517, %v520, %v522
    %v524 = vsel %vm516, %v503, %v506
    %v525 = vsel %vm519, %v512, 920167782
    %v526 = vsel %vm518, %v509, %v525
    %v527 = vsel %vm517, %v524, %v526
    %v528 = vsel %vm516, %v506, %v509
    %v529 = vsel %vm519, %v515, 1326507024
    %v530 = vsel %vm518, %v512, %v529
    %v531 = vsel %vm517, %v528, %v530
    %v532 = vshll.u32 %v492, 8
    %v533 = vmul.u32.u64.compose %v532, %v531
    %v534 = vextract.low.u32 %v533
    %v535 = vextract.high.u32 %v533
    %v536 = vmul.u32.u64.compose %v532, %v527
    %v537 = vextract.low.u32 %v536
    %v538 = vextract.high.u32 %v536
    %v539 = vmul.u32 %v532, %v523
    %v540 = vadd.s32 %v535, %v537
    %vm541 = vc.u32 %v535, %v537
    %v542 = vadd.s32 %v538, 1
    %v543 = vsel %vm541, %v542, %v538
    %v544 = vadd.s32 %v539, %v543
    %v545 = vadd.s32 %v544, 536870912
    %v546 = vshrl.u32 %v545, 30
    %v547 = vshll.u32 %v546, 30
    %v548 = vsub.s32 %v544, %v547
    %vm549 = vcmp.lt.s32.totalorder %v548, 0
    %v550 = vsub.s32 0, %v548
    %v551 = vsel %vm549, %v550, %v548
    %v552 = vclz %v551
    %v553 = vsub.s32 %v552, 2
    %vm554 = vcmp.gt.s32.totalorder 0, %v553
    %v555 = vsel %vm554, 0, %v553
    %v556 = vsub.s32 32, %v555
    %v557 = vshll.u32 %v548, %v555
    %v558 = vshrl.u32 %v540, %v556
    %v559 = vor.u32 %v557, %v558
    %v560 = vsub.s32 4294967266, %v555
    %v561 = vadd.s32 %v560, 127
    %v562 = vshll.u32 %v561, 23
    %v563 = vor.u32 4788187, %v562
    %v564 = vand.u32 2147483647, %v563
    %v566 = vcvt.s32.f32 %v559
    %v567 = vmul.f32 %v566, %v564
    %v568 = vxor.u32 %v567, 2147483648
    %v569 = vsel %vm486, %v568, %v567
    %v570 = vsub.s32 4, %v546
    %v571 = vsel %vm486, %v570, %v546
    %v572 = vsel %vm485, %v481, %v569
    %v573 = vsel %vm485, 0, %v571
    %v574 = vcosq.f32.pop %v572
    %v575 = vsinq.f32.pop %v572
    %vm576 = vweird.f32 %v481
    %v577 = vadd.s32 %v573, 3
    %v578 = vand.u32 %v577, 3
    %vm579 = vcmp.lt.s32.totalorder %v578, 2
    %vm580 = vcmp.eq.s32.totalorder %v578, 0
    %v581 = vxor.u32 %v575, 2147483648
    %v582 = vsel %vm580, %v574, %v581
    %vm583 = vcmp.eq.s32.totalorder %v578, 2
    %v584 = vxor.u32 %v574, 2147483648
    %v585 = vsel %vm583, %v584, %v575
    %v586 = vsel %vm579, %v582, %v585
    %v587 = vsel %vm576, nan, %v586
    %v588 = vand.u32 2147483647, %v481
    %vm589 = vcmp.le.f32.partialorder %v588, 0.7853982
    %vm590 = vcmp.lt.s32.totalorder %v481, 0
    %v591 = vand.u32 %v481, 2139095040
    %v592 = vshrl.u32 %v591, 23
    %v593 = vsub.s32 %v592, 127
    %v594 = vand.u32 2147483647, %v481
    %v595 = vand.u32 %v594, 8388607
    %v596 = vor.u32 %v595, 8388608
    %v597 = vsub.s32 0, %v596
    %v598 = vadd.s32 %v593, 1
    %vm599 = vcmp.gt.s32.totalorder %v598, 0
    %v600 = vsel %vm599, %v598, 0
    %v601 = vshrl.u32 %v600, 5
    %v602 = vand.u32 %v600, 31
    %v603 = vsub.s32 32, %v602
    %v604 = vshrl.u32 683565275, %v603
    %v605 = vshll.u32 683565275, %v602
    %v606 = vshrl.u32 2475754826, %v603
    %v607 = vor.u32 %v605, %v606
    %v608 = vshll.u32 2475754826, %v602
    %v609 = vshrl.u32 2131351028, %v603
    %v610 = vor.u32 %v608, %v609
    %v611 = vshll.u32 2131351028, %v602
    %v612 = vshrl.u32 2102212464, %v603
    %v613 = vor.u32 %v611, %v612
    %v614 = vshll.u32 2102212464, %v602
    %v615 = vshrl.u32 920167782, %v603
    %v616 = vor.u32 %v614, %v615
    %v617 = vshll.u32 920167782, %v602
    %v618 = vshrl.u32 1326507024, %v603
    %v619 = vor.u32 %v617, %v618
    %vm620 = vcmp.lt.s32.totalorder %v601, 1
    %vm621 = vcmp.lt.s32.totalorder %v601, 2
    %vm622 = vcmp.lt.s32.totalorder %v601, 3
    %vm623 = vcmp.lt.s32.totalorder %v601, 4
    %v624 = vsel %vm620, %v604, %v607
    %v625 = vsel %vm623, %v613, 2102212464
    %v626 = vsel %vm622, %v610, %v625
    %v627 = vsel %vm621, %v624, %v626
    %v628 = vsel %vm620, %v607, %v610
    %v629 = vsel %vm623, %v616, 920167782
    %v630 = vsel %vm622, %v613, %v629
    %v631 = vsel %vm621, %v628, %v630
    %v632 = vsel %vm620, %v610, %v613
    %v633 = vsel %vm623, %v619, 1326507024
    %v634 = vsel %vm622, %v616, %v633
    %v635 = vsel %vm621, %v632, %v634
    %v636 = vshll.u32 %v596, 8
    %v637 = vmul.u32.u64.compose %v636, %v635
    %v638 = vextract.low.u32 %v637
    %v639 = vextract.high.u32 %v637
    %v640 = vmul.u32.u64.compose %v636, %v631
    %v641 = vextract.low.u32 %v640
    %v642 = vextract.high.u32 %v640
    %v643 = vmul.u32 %v636, %v627
    %v644 = vadd.s32 %v639, %v641
    %vm645 = vc.u32 %v639, %v641
    %v646 = vadd.s32 %v642, 1
    %v647 = vsel %vm645, %v646, %v642
    %v648 = vadd.s32 %v643, %v647
    %v649 = vadd.s32 %v648, 536870912
    %v650 = vshrl.u32 %v649, 30
    %v651 = vshll.u32 %v650, 30
    %v652 = vsub.s32 %v648, %v651
    %vm653 = vcmp.lt.s32.totalorder %v652, 0
    %v654 = vsub.s32 0, %v652
    %v655 = vsel %vm653, %v654, %v652
    %v656 = vclz %v655
    %v657 = vsub.s32 %v656, 2
    %vm658 = vcmp.gt.s32.totalorder 0, %v657
    %v659 = vsel %vm658, 0, %v657
    %v660 = vsub.s32 32, %v659
    %v661 = vshll.u32 %v652, %v659
    %v662 = vshrl.u32 %v644, %v660
    %v663 = vor.u32 %v661, %v662
    %v664 = vsub.s32 4294967266, %v659
    %v665 = vadd.s32 %v664, 127
    %v666 = vshll.u32 %v665, 23
    %v667 = vor.u32 4788187, %v666
    %v668 = vand.u32 2147483647, %v667
    %v670 = vcvt.s32.f32 %v663
    %v671 = vmul.f32 %v670, %v668
    %v672 = vxor.u32 %v671, 2147483648
    %v673 = vsel %vm590, %v672, %v671
    %v674 = vsub.s32 4, %v650
    %v675 = vsel %vm590, %v674, %v650
    %v676 = vsel %vm589, %v481, %v673
    %v677 = vsel %vm589, 0, %v675
    %v678 = vcosq.f32.pop %v676
    %v679 = vsinq.f32.pop %v676
    %vm680 = vweird.f32 %v481
    %v681 = vand.u32 %v677, 3
    %vm682 = vcmp.lt.s32.totalorder %v681, 2
    %vm683 = vcmp.eq.s32.totalorder %v681, 0
    %v684 = vxor.u32 %v679, 2147483648
    %v685 = vsel %vm683, %v678, %v684
    %vm686 = vcmp.eq.s32.totalorder %v681, 2
    %v687 = vxor.u32 %v678, 2147483648
    %v688 = vsel %vm686, %v687, %v679
    %v689 = vsel %vm682, %v685, %v688
    %v690 = vsel %vm680, nan, %v689
    %v691 = vsel %vm483, 1, 0
    %v692 = vlaneseq
    %v693 = vshrl.u32 %v692, 7
    %v694 = vsub.s32 0, %v693
    %v695 = vrot.slane %v691, %v694
    %vm696 = vcmp.eq.s32.totalorder %v695, 1
    %v697 = vsel %vm696, %v587, %v690
    %698 = vst [vmem:[#allocation2] sm:$0xff] %v697
    // Predicated region
    $region18: #{tpu_custom_call.1} parent=1 // pred_check
      _
    $region19: #{tpu_custom_call.1} parent=1 // pred_check_branch
      %700 = sbr.rel (0) target = $region21
    $region20: #{tpu_custom_call.1} parent=1 // pred_region
      %s702 = ssub.s32 128, 128
      %703 = vsyncadd [#allocation3], %s702
      %s705 = sshll.u32 [#allocation2], 4
      %s706 = int_to_ptr.vmem [resolvable:$true] %s705
      %708 = dma.vmem_to_hbm [thread:$0]  %s706, 128, %s4, [#allocation3]
    $region21: #{tpu_custom_call.1} parent=1 // pred_fallthru
      _
    // Predicated region
    $region22: #{tpu_custom_call.1} parent=1 // pred_check
      _
    $region23: #{tpu_custom_call.1} parent=1 // pred_check_branch
      %710 = sbr.rel (0) target = $region25
    $region24: #{tpu_custom_call.1} parent=1 // pred_region
      %711 = dma.done [#allocation3], 128
    $region25: #{tpu_custom_call.1} parent=1 // pred_fallthru
      _
    %712 = vsyncpa [#allocation3], 1

</llo_original>
